<compile_context>
chip_gen: v7x
topology: tpu7x:2x2x1
jax: 0.10.0
libtpu: 0.0.40
codegen_flags: <defaults>
</compile_context>

<pallas_src>
import jax
import jax.numpy as jnp
from jax.experimental import pallas as pl
from jax.experimental.pallas import tpu as pltpu

_LANE = 128  # lane width (last tile dim)


def _round_up(x, m):
    return ((x + m - 1) // m) * m


def _vmem_capacity_bytes():
    """Per-core VMEM capacity; conservative (v7x-sized) fallback if unknown."""
    try:
        info = pltpu.get_tpu_info()
        cap = int(getattr(info, "vmem_capacity_bytes", 0))
        if cap > 0:
            return cap
    except Exception:
        pass
    return 64 * 1024 * 1024  # v7x per-TC size: safe lower bound everywhere


def _linear_kernel(emb_ref, w_ref, b_ref, out_ref):
    # emb_ref: (TB, D) input dtype; w_ref: (D, TN) input dtype;
    # b_ref: (1, TN) f32; out_ref: (TB, TN) out dtype.
    # MXU matmul with f32 accumulation; bias broadcasts over the sublane axis.
    out_ref[...] = (
        jnp.dot(emb_ref[...], w_ref[...], preferred_element_type=jnp.float32)
        + b_ref[...]
    ).astype(out_ref.dtype)


def prepare_linear_params(weight, bias, input_dtype=jnp.bfloat16):
    """One-time parameter prep (keep OUT of the per-step hot path).

    weight: [T, D] (torch.nn.Linear layout), bias: [T].
    Returns:
      w_dt: [D, Tp] weight, transposed and zero-padded on the tag axis up to a
            multiple of 128 so kernel output stores are lane-dense.
      b2:   [1, Tp] f32 bias, zero-padded the same way.
    """
    T, D = weight.shape
    Tp = _round_up(max(T, 1), _LANE)
    w_dt = jnp.zeros((D, Tp), dtype=input_dtype).at[:, :T].set(
        weight.T.astype(input_dtype))
    b2 = jnp.zeros((1, Tp), dtype=jnp.float32).at[:, :T].set(
        bias.astype(jnp.float32))
    return w_dt, b2


def _pick_tiles(B_pad, D, Tp, in_itemsize, out_itemsize, row_align, vmem_budget):
    """Choose (TN, TB) so that 2x weight/bias tiles + 2x (emb,out) batch tiles
    fit the per-generation VMEM budget."""
    # --- tag tile (TN). Weight IS double-buffered by the pipeline -> x2.
    # Keep the (doubled) weight tile under ~half the budget; prefer multiples
    # of 256 to fill the 2x256x256 MXU on v6e/v7x (128 still fine on v5e).
    w_bytes_per_col = 2 * D * in_itemsize
    tn_cap = max(vmem_budget // 2, 1 << 20) // max(w_bytes_per_col, 1)
    if tn_cap >= 256 and Tp >= 256:
        TN = min(Tp, (tn_cap // 256) * 256)
    else:
        TN = min(Tp, max(_LANE, (tn_cap // _LANE) * _LANE))
    TN = max(min(TN, Tp), _LANE)

    # --- batch tile (TB): whatever remains after the (doubled) weight + bias.
    resident = 2 * (D * TN * in_itemsize + TN * 4)
    remaining = max(vmem_budget - resident, 1 << 20)
    per_row = 2 * (D * in_itemsize + TN * out_itemsize)  # 2x (emb row + out row)
    TB = (remaining // per_row) // row_align * row_align
    TB = max(TB, 8)
    TB = min(TB, 2048, B_pad)

    # Give the v7x megacore (2 TCs) at least two grid blocks to shard.
    if pl.cdiv(Tp, TN) * pl.cdiv(B_pad, TB) < 2 and TB > 8:
        half = max(8, _round_up(TB // 2, 8))
        if half < TB:
            TB = half
    return int(TN), int(TB)


def linear_classifier_forward(emb, w_dt, b2, tag_size,
                              input_dtype=jnp.bfloat16,
                              out_dtype=jnp.float32):
    """emb: [B, D]; w_dt/b2 from prepare_linear_params().

    Returns [B, tag_size] in out_dtype.
    """
    B, D = emb.shape
    Tp = w_dt.shape[1]
    in_itemsize = jnp.dtype(input_dtype).itemsize
    out_itemsize = jnp.dtype(out_dtype).itemsize
    # bf16 packs two rows per sublane -> prefer 16-row batch tiles.
    row_align = 16 if in_itemsize == 2 else 8

    vmem_cap = _vmem_capacity_bytes()
    vmem_budget = int(vmem_cap * 3) // 4  # ~48 MiB on v7x, ~96 MiB on v5e/v6e

    # Pad batch only to the next multiple of 8 (usually a no-op) so block
    # shapes never exceed the array; ragged trailing blocks are masked.
    B_pad = _round_up(max(B, 1), 8)
    emb_in = emb if emb.dtype == input_dtype else emb.astype(input_dtype)
    if B_pad != B:
        emb_in = jnp.pad(emb_in, ((0, B_pad - B), (0, 0)))
    if w_dt.dtype != input_dtype:
        w_dt = w_dt.astype(input_dtype)

    TN, TB = _pick_tiles(B_pad, D, Tp, in_itemsize, out_itemsize,
                         row_align, vmem_budget)
    n_tag = pl.cdiv(Tp, TN)
    n_bat = pl.cdiv(B_pad, TB)

    # Weight & bias double-buffered (x2) + double-buffered emb/out batch tiles.
    vmem_need = (2 * (D * TN * in_itemsize + TN * 4)
                 + 2 * TB * (D * in_itemsize + TN * out_itemsize))
    vmem_limit = int(min(vmem_cap - (4 << 20),
                         max(32 << 20, vmem_need + (8 << 20))))

    cost = pl.CostEstimate(
        flops=2 * B_pad * D * Tp,
        transcendentals=0,
        bytes_accessed=(in_itemsize * (n_tag * B_pad * D + D * Tp)
                        + 4 * Tp + out_itemsize * B_pad * Tp),
    )

    out_padded = pl.pallas_call(
        _linear_kernel,
        out_shape=jax.ShapeDtypeStruct((B_pad, Tp), out_dtype),
        grid=(n_tag, n_bat),  # tag outer: each weight tile reused over batch
        in_specs=[
            pl.BlockSpec((TB, D), lambda n, b: (b, 0)),   # emb  (batch-pipelined)
            pl.BlockSpec((D, TN), lambda n, b: (0, n)),   # weight tile
            pl.BlockSpec((1, TN), lambda n, b: (0, n)),   # bias tile
        ],
        out_specs=pl.BlockSpec((TB, TN), lambda n, b: (b, n)),
        compiler_params=pltpu.CompilerParams(
            dimension_semantics=("parallel", "parallel"),
            vmem_limit_bytes=vmem_limit,
        ),
        cost_estimate=cost,
    )(emb_in, w_dt, b2)

    # Slice off batch padding (<=7 rows) and the lane padding of the tag axis.
    return out_padded[:B, :tag_size]


if __name__ == "__main__":
    # Small shapes consistent with the module: [batch, embed_dim] -> [batch, tag_size]
    batch, embed_dim, tag_size = 8, 32, 4

    key = jax.random.PRNGKey(0)
    k_emb, k_w, k_b = jax.random.split(key, 3)

    emb = jax.random.normal(k_emb, (batch, embed_dim), dtype=jnp.float32)
    bound = 1.0 / (embed_dim ** 0.5)
    weight = jax.random.uniform(
        k_w, (tag_size, embed_dim), minval=-bound, maxval=bound, dtype=jnp.float32)
    bias = jax.random.uniform(
        k_b, (tag_size,), minval=-bound, maxval=bound, dtype=jnp.float32)

    ref = emb @ weight.T + bias

    # Validation path: f32 inputs, tight tolerance.
    w_f32, b_f32 = prepare_linear_params(weight, bias, input_dtype=jnp.float32)
    out_f32 = linear_classifier_forward(emb, w_f32, b_f32, tag_size,
                                        input_dtype=jnp.float32)
    out_f32 = jax.block_until_ready(out_f32)
    assert out_f32.shape == (batch, tag_size)
    assert jnp.allclose(out_f32, ref, atol=1e-5, rtol=1e-5)

    # Production path (default): bf16 inputs, f32 accumulation.
    w_bf, b_bf = prepare_linear_params(weight, bias)      # bf16 default
    out_bf = linear_classifier_forward(emb, w_bf, b_bf, tag_size)
    out_bf = jax.block_until_ready(out_bf)
    assert out_bf.shape == (batch, tag_size)
    assert jnp.allclose(out_bf, ref, atol=5e-2, rtol=5e-2)

    print("KERNEL_OK")
</pallas_src>

<mosaic_0001>
module attributes {stable_mosaic.version = 11 : i64} {
  func.func @_linear_kernel(%arg0: i32, %arg1: i32, %arg2: memref<8x32xf32, #tpu.memory_space<vmem>>, %arg3: memref<32x128xf32, #tpu.memory_space<vmem>>, %arg4: memref<1x128xf32, #tpu.memory_space<vmem>>, %arg5: memref<8x128xf32, #tpu.memory_space<vmem>>) attributes {dimension_semantics = [#tpu.dimension_semantics<parallel>, #tpu.dimension_semantics<parallel>], iteration_bounds = array<i64: 1, 1>, scalar_prefetch = 0 : i64, scratch_operands = 0 : i64, tpu.core_type = #tpu.core_type<tc>, window_params = [{transform_indices = @transform_0, window_bounds = array<i64: 8, 32>}, {transform_indices = @transform_1, window_bounds = array<i64: 32, 128>}, {transform_indices = @transform_2, window_bounds = array<i64: 1, 128>}, {transform_indices = @transform_3, window_bounds = array<i64: 8, 128>}]} {
    %c0 = arith.constant 0 : index
    %c0_0 = arith.constant 0 : index
    %0 = vector.load %arg2[%c0, %c0_0] : memref<8x32xf32, #tpu.memory_space<vmem>>, vector<8x32xf32>
    %c0_1 = arith.constant 0 : index
    %c0_2 = arith.constant 0 : index
    %1 = vector.load %arg3[%c0_1, %c0_2] : memref<32x128xf32, #tpu.memory_space<vmem>>, vector<32x128xf32>
    %cst = arith.constant dense<0.000000e+00> : vector<8x128xf32>
    %2 = tpu.matmul %0, %1, %cst {dimension_numbers = #tpu.dot_dimension_numbers<[1], [0], [0], [1], [0, 0, 1, 1], [], []>} : vector<8x32xf32>, vector<32x128xf32>, vector<8x128xf32> -> vector<8x128xf32>
    %c0_3 = arith.constant 0 : index
    %c0_4 = arith.constant 0 : index
    %3 = vector.load %arg4[%c0_3, %c0_4] : memref<1x128xf32, #tpu.memory_space<vmem>>, vector<1x128xf32>
    %4 = vector.broadcast %3 : vector<1x128xf32> to vector<8x128xf32>
    %5 = arith.addf %2, %4 : vector<8x128xf32>
    %c0_5 = arith.constant 0 : index
    %c0_6 = arith.constant 0 : index
    %6 = vector.load %arg5[%c0_5, %c0_6] : memref<8x128xf32, #tpu.memory_space<vmem>>, vector<8x128xf32>
    tpu.vector_store %arg5[%c0_5, %c0_6], %5 {strides = array<i32>} : memref<8x128xf32, #tpu.memory_space<vmem>>, vector<8x128xf32>,
    return
  }
  func.func @transform_0(%arg0: i32, %arg1: i32) -> (i32, i32) {
    %c0_i32 = arith.constant 0 : i32
    %c0_i32_0 = arith.constant 0 : i32
    return %arg1, %c0_i32 : i32, i32
  }
  func.func @transform_1(%arg0: i32, %arg1: i32) -> (i32, i32) {
    %c0_i32 = arith.constant 0 : i32
    %c0_i32_0 = arith.constant 0 : i32
    return %c0_i32, %arg0 : i32, i32
  }
  func.func @transform_2(%arg0: i32, %arg1: i32) -> (i32, i32) {
    %c0_i32 = arith.constant 0 : i32
    %c0_i32_0 = arith.constant 0 : i32
    return %c0_i32, %arg0 : i32, i32
  }
  func.func @transform_3(%arg0: i32, %arg1: i32) -> (i32, i32) {
    %c0_i32 = arith.constant 0 : i32
    return %arg1, %arg0 : i32, i32
  }
}

</mosaic_0001>

<llo_original>
// kernel: tpu_custom_call.1
$region0: #{tpu_custom_call.1}
  #allocation0 [shape = 'u32[]', space=smem, size = 0x4, offset = 0x4, fixed_abs, tag = 'smem constant byte address 0x4 - core index']
  #allocation1 [shape = 'u32[144,128]{1,0:T(1,128)}', space=vmem, size = 0x12000, scoped, tag = 'internal scratch']
  %s0 = inlined_call_operand.hbm [shape: f32[8,32], index: 0, kind: input, shape index: {}]
  %s1 = inlined_call_operand.hbm [shape: f32[32,128], index: 1, kind: input, shape index: {}]
  %s2 = inlined_call_operand.vmem [shape: f32[1,128], index: 2, kind: input, shape index: {}]
  %s3 = inlined_call_operand.hbm [shape: f32[8,128], index: 3, kind: output, shape index: {}]
  %s4 = sld [smem:[#allocation0]]
  $region30: #{tpu_custom_call.1} parent=0
    _
  %s6 = ssub.s32 1, %s4
  %s7 = scalar_select 0, %s6, %s4
  $region1: #{tpu_custom_call.1} parent=0
    #allocation2 [shape = 'u8[4096]{0}', space=vmem, size = 0x1000, scoped, tag = 'input window, operand 0, single buffered']
    #allocation3 [shape = 's32[1]{0}', space=sflag, size = 0x4, scoped, tag = 'scoped memory for tpu_custom_call.1']
    #allocation4 [shape = 's32[1]{0}', space=sflag, size = 0x4, scoped, tag = 'scoped memory for tpu_custom_call.1']
    #allocation5 [shape = 'u8[16384]{0}', space=vmem, size = 0x4000, scoped, tag = 'input window, operand 1, single buffered']
    #allocation6 [shape = 's32[1]{0}', space=sflag, size = 0x4, scoped, tag = 'scoped memory for tpu_custom_call.1']
    #allocation7 [shape = 'u8[4096]{0}', space=vmem, size = 0x1000, scoped, tag = 'output window, operand 0, single buffered']
    %8 = vsyncpa [#allocation3], 0
    %9 = vsyncpa [#allocation6], 0
    %10 = vsyncpa [#allocation4], 0
    // Predicated region
    $region2: #{tpu_custom_call.1} parent=1 // pred_check
      _
    $region3: #{tpu_custom_call.1} parent=1 // pred_check_branch
      %12 = sbr.rel (0) target = $region5
    $region4: #{tpu_custom_call.1} parent=1 // pred_region
      %s14 = ssub.s32 128, 128
      %15 = vsyncadd [#allocation3], %s14
      %s17 = sshll.u32 [#allocation2], 4
      %s18 = int_to_ptr.vmem [resolvable:$true] %s17
      %20 = dma.hbm_to_vmem [thread:$0]  %s0, 128, %s18, [#allocation3]
    $region5: #{tpu_custom_call.1} parent=1 // pred_fallthru
      _
    // Predicated region
    $region6: #{tpu_custom_call.1} parent=1 // pred_check
      _
    $region7: #{tpu_custom_call.1} parent=1 // pred_check_branch
      %22 = sbr.rel (0) target = $region9
    $region8: #{tpu_custom_call.1} parent=1 // pred_region
      %s24 = ssub.s32 512, 512
      %25 = vsyncadd [#allocation6], %s24
      %s26 = sshll.u32 [#allocation5], 4
      %s27 = int_to_ptr.vmem [resolvable:$true] %s26
      %32 = dma.hbm_to_vmem [thread:$0]  %s1, 512, %s27, [#allocation6], 128, 128, 8
    $region9: #{tpu_custom_call.1} parent=1 // pred_fallthru
      _
    // Predicated region
    $region10: #{tpu_custom_call.1} parent=1 // pred_check
      _
    $region11: #{tpu_custom_call.1} parent=1 // pred_check_branch
      %34 = sbr.rel (0) target = $region13
    $region12: #{tpu_custom_call.1} parent=1 // pred_region
      _
    $region13: #{tpu_custom_call.1} parent=1 // pred_fallthru
      _
    // Predicated region
    $region14: #{tpu_custom_call.1} parent=1 // pred_check
      _
    $region15: #{tpu_custom_call.1} parent=1 // pred_check_branch
      %36 = sbr.rel (0) target = $region17
    $region16: #{tpu_custom_call.1} parent=1 // pred_region
      %37 = dma.done [#allocation3], 128
    $region17: #{tpu_custom_call.1} parent=1 // pred_fallthru
      _
    // Predicated region
    $region18: #{tpu_custom_call.1} parent=1 // pred_check
      _
    $region19: #{tpu_custom_call.1} parent=1 // pred_check_branch
      %39 = sbr.rel (0) target = $region21
    $region20: #{tpu_custom_call.1} parent=1 // pred_region
      %40 = dma.done [#allocation6], 512
    $region21: #{tpu_custom_call.1} parent=1 // pred_fallthru
      _
    %v41 = vld [vmem:[#allocation2] sm:$0xff]
    %v42 = vld [vmem:[#allocation5] sm:$0xff]
    %v43 = vld [vmem:[#allocation5 + $0x8] sm:$0xff]
    %v44 = vld [vmem:[#allocation5 + $0x10] sm:$0xff]
    %v45 = vld [vmem:[#allocation5 + $0x18] sm:$0xff]
    %v46 = vld [vmem:[%s2] sm:$0x1]
    %v48 = vlaneseq
    %v49 = vshrl.u32 %v48, 7
    %v50 = vsub.s32 0, %v49
    %v51 = vrot.slane %v46, %v50
    %vm53 = vcmask 261120
    %v55 = vsel %vm53, %v41, 0
    %57 = vmatprep.subr.mxu0 0.0
    %58 = vmatpush1.msra.mxu0 %v42
    %59 = vmatprep.subr.mxu0 0.0
    %60 = vmatpush1.msra.mxu0 %v43
    %61 = vmatprep.subr.mxu0 0.0
    %62 = vmatpush1.msra.mxu0 %v44
    %63 = vmatprep.subr.mxu0 0.0
    %64 = vmatpush1.msra.mxu0 %v45
    %65 = vmatprep.subr.mxu0 0.0
    %66 = vmatpush1.msra.mxu0 0.0
    %67 = vmatprep.subr.mxu0 0.0
    %68 = vmatpush1.msra.mxu0 0.0
    %69 = vmatprep.subr.mxu0 0.0
    %70 = vmatpush1.msra.mxu0 0.0
    %71 = vmatprep.subr.mxu0 0.0
    %72 = vmatpush1.msra.mxu0 0.0
    %73 = vmatprep.subr.mxu0 0.0
    %74 = vmatpush1.msra.mxu0 0.0
    %75 = vmatprep.subr.mxu0 0.0
    %76 = vmatpush1.msra.mxu0 0.0
    %77 = vmatprep.subr.mxu0 0.0
    %78 = vmatpush1.msra.mxu0 0.0
    %79 = vmatprep.subr.mxu0 0.0
    %80 = vmatpush1.msra.mxu0 0.0
    %81 = vmatprep.subr.mxu0 0.0
    %82 = vmatpush1.msra.mxu0 0.0
    %83 = vmatprep.subr.mxu0 0.0
    %84 = vmatpush1.msra.mxu0 0.0
    %85 = vmatprep.subr.mxu0 0.0
    %86 = vmatpush1.msra.mxu0 0.0
    %87 = vmatprep.subr.mxu0 0.0
    %88 = vmatpush1.msra.mxu0 0.0
    %89 = vmatprep.subr.mxu0 0.0
    %90 = vmatpush1.msra.mxu0 0.0
    %91 = vmatprep.subr.mxu0 0.0
    %92 = vmatpush1.msra.mxu0 0.0
    %93 = vmatprep.subr.mxu0 0.0
    %94 = vmatpush1.msra.mxu0 0.0
    %95 = vmatprep.subr.mxu0 0.0
    %96 = vmatpush1.msra.mxu0 0.0
    %97 = vmatprep.subr.mxu0 0.0
    %98 = vmatpush1.msra.mxu0 0.0
    %99 = vmatprep.subr.mxu0 0.0
    %100 = vmatpush1.msra.mxu0 0.0
    %101 = vmatprep.subr.mxu0 0.0
    %102 = vmatpush1.msra.mxu0 0.0
    %103 = vmatprep.subr.mxu0 0.0
    %104 = vmatpush1.msra.mxu0 0.0
    %105 = vmatprep.subr.mxu0 0.0
    %106 = vmatpush1.msra.mxu0 0.0
    %107 = vmatprep.subr.mxu0 0.0
    %108 = vmatpush1.msra.mxu0 0.0
    %109 = vmatprep.subr.mxu0 0.0
    %110 = vmatpush1.msra.mxu0 0.0
    %111 = vmatprep.subr.mxu0 0.0
    %112 = vmatpush1.msra.mxu0 0.0
    %113 = vmatprep.subr.mxu0 0.0
    %114 = vmatpush1.msra.mxu0 0.0
    %115 = vmatprep.subr.mxu0 0.0
    %116 = vmatpush1.msra.mxu0 0.0
    %117 = vmatprep.subr.mxu0 0.0
    %118 = vmatpush1.msra.mxu0 0.0
    %119 = vmatprep.subr.mxu0 0.0
    %120 = vmatpush1.msra.mxu0 0.0
    %121 = vmatprep.mubr.f32.mxu0 0.0
    %122 = vmatmul.mubr.f32.gmra.mrb[0].mxu0 %v55
    %v123 = vpop.f32.mrb[0].mxu0
    %v124 = vadd.f32 %v51, %v123
    %v125 = vpop.f32.mrb[0].mxu0
    %126 = vdwg.mxu0
    %127 = vst [vmem:[#allocation7] sm:$0xff] %v124
    // Predicated region
    $region22: #{tpu_custom_call.1} parent=1 // pred_check
      _
    $region23: #{tpu_custom_call.1} parent=1 // pred_check_branch
      %129 = sbr.rel (0) target = $region25
    $region24: #{tpu_custom_call.1} parent=1 // pred_region
      %s131 = ssub.s32 128, 128
      %132 = vsyncadd [#allocation4], %s131
      %s134 = sshll.u32 [#allocation7], 4
      %s135 = int_to_ptr.vmem [resolvable:$true] %s134
      %137 = dma.vmem_to_hbm [thread:$0]  %s135, 128, %s3, [#allocation4]
    $region25: #{tpu_custom_call.1} parent=1 // pred_fallthru
      _
    // Predicated region
    $region26: #{tpu_custom_call.1} parent=1 // pred_check
      _
    $region27: #{tpu_custom_call.1} parent=1 // pred_check_branch
      %139 = sbr.rel (0) target = $region29
    $region28: #{tpu_custom_call.1} parent=1 // pred_region
      %140 = dma.done [#allocation4], 128
    $region29: #{tpu_custom_call.1} parent=1 // pred_fallthru
      _
    %141 = vsyncpa [#allocation3], 1
    %142 = vsyncpa [#allocation6], 1
    %143 = vsyncpa [#allocation4], 1

</llo_original>
